<compile_context>
chip_gen: v6e
topology: v6e:2x2x1
jax: 0.10.0
libtpu: 0.0.40
codegen_flags: <defaults>
</compile_context>

<pallas_src>
import math

import jax
import jax.numpy as jnp
from jax import lax
from jax.experimental import pallas as pl
from jax.experimental.pallas import tpu as pltpu


def _cdiv(a, b):
    return -(-a // b)


def _hash_u32(x):
    # "lowbias32" integer hash (Chris Wellons): good avalanche on sequential counters.
    x = x ^ (x >> 16)
    x = x * jnp.uint32(0x7FEB352D)
    x = x ^ (x >> 15)
    x = x * jnp.uint32(0x846CA68B)
    x = x ^ (x >> 16)
    return x


def _norminv(u):
    """Standard-normal quantile: sqrt(2) * erfinv(2u-1), Giles' f32 approximation."""
    x = 2.0 * u - 1.0                         # in (-1, 1), never hits the endpoints
    w = -jnp.log((1.0 - x) * (1.0 + x))

    # central region (w < 5  <=>  |x| < ~0.993)
    wa = w - 2.5
    pa = jnp.float32(2.81022636e-08)
    for c in (3.43273939e-07, -3.5233877e-06, -4.39150654e-06, 0.00021858087,
              -0.00125372503, -0.00417768164, 0.246640727, 1.50140941):
        pa = pa * wa + c

    # tails (clamp keeps sqrt's argument non-negative; branch is selected away otherwise)
    wb = jnp.sqrt(jnp.maximum(w, 5.0)) - 3.0
    pb = jnp.float32(-0.000200214257)
    for c in (0.000100950558, 0.00134934322, -0.00367342844, 0.00573950773,
              -0.0076224613, 0.00943887047, 1.00167406, 2.83297682):
        pb = pb * wb + c

    erfinv_x = jnp.where(w < 5.0, pa, pb) * x
    return jnp.float32(math.sqrt(2.0)) * erfinv_x


def _make_kernel(sigma, tm, c):
    sigma = float(sigma)

    def kernel(seed_ref, x_ref, o_ref):
        i = pl.program_id(0)
        row = lax.broadcasted_iota(jnp.int32, (tm, c), 0)
        col = lax.broadcasted_iota(jnp.int32, (tm, c), 1)
        # Global flat element index -> noise is unique per element and independent
        # of the tiling / megacore sharding (wraps at 2^32 elements; fine for noise).
        gidx = ((row + i * tm).astype(jnp.uint32) * jnp.uint32(c)
                + col.astype(jnp.uint32))
        key = (seed_ref[0].astype(jnp.uint32) * jnp.uint32(0x9E3779B9)
               + jnp.uint32(0x7F4A7C15))
        h = _hash_u32(gidx ^ key)
        h = _hash_u32(h + key)
        # Top 23 bits -> uniform in (0, 1), exactly representable in f32,
        # never 0 or 1 (keeps the log() in _norminv finite).
        bits = (h >> 9).astype(jnp.int32)
        u = (bits.astype(jnp.float32) + 0.5) * (1.0 / 8388608.0)
        z = _norminv(u)
        o_ref[...] = (x_ref[...].astype(jnp.float32) + sigma * z).astype(o_ref.dtype)

    return kernel


def gaussian_noise(x, seed, *, std=0.1, sigma=None, training=True):
    """JAX/Pallas equivalent of GaussianNoise.forward (adapt=False, trainable=False).

    x     : float array of any shape (e.g. NCHW activations)
    seed  : int32 scalar -- pass a fresh seed each forward pass for fresh noise
    std   : module's `std` (static python float)
    sigma : optional override of the sigma parameter value; defaults to std,
            matching nn.Parameter(torch.ones(1) * std) with trainable=False.
    """
    if (not training) or std == 0:
        return x
    if sigma is None:
        sigma = std

    orig_shape = x.shape
    n = x.size
    itemsize = jnp.dtype(x.dtype).itemsize
    sub = 8 * max(1, 4 // itemsize)          # sublane granularity for this dtype

    # Lane-dense slab: last dim C is a multiple of 128; block is (TM, C).
    lane = 128
    C = 2048
    while C > lane and n < C * sub:
        C //= 2
    rows = _cdiv(n, C)
    TM = 256
    while TM > sub and rows < TM:
        TM //= 2
    rows_pad = _cdiv(rows, TM) * TM
    grid = (rows_pad // TM,)

    flat = x.reshape(-1)
    pad = rows_pad * C - n
    if pad:
        flat = jnp.pad(flat, (0, pad))
    x2d = flat.reshape(rows_pad, C)

    seed_arr = jnp.asarray([seed], dtype=jnp.int32)
    kernel = _make_kernel(sigma, TM, C)

    out2d = pl.pallas_call(
        kernel,
        out_shape=jax.ShapeDtypeStruct(x2d.shape, x2d.dtype),
        grid=grid,
        in_specs=[
            pl.BlockSpec(memory_space=pltpu.MemorySpace.SMEM),   # seed scalar
            pl.BlockSpec((TM, C), lambda i: (i, 0)),             # x tile
        ],
        out_specs=pl.BlockSpec((TM, C), lambda i: (i, 0)),
        compiler_params=pltpu.CompilerParams(
            dimension_semantics=("parallel",),    # blocks independent; megacore-shardable
            vmem_limit_bytes=32 * 1024 * 1024,    # <= 2 MiB blocks, ~8 MiB live (fits v7x 64 MiB)
        ),
        # NOTE: for large activations under jit, input_output_aliases={1: 0} can
        # additionally donate x's buffer to the output.
    )(seed_arr, x2d)

    out = out2d.reshape(-1)
    if pad:
        out = out[:n]
    return out.reshape(orig_shape)


# TODO(synk): adapt=True path (host-side EMA of running_std via x.std().item()) is
# module-state mutation outside the hot path; not implemented (default adapt=False).
# TODO(synk): trainable=True would need sigma as a runtime operand + custom VJP;
# kept as a compile-time constant here (default trainable=False).


if __name__ == "__main__":
    key = jax.random.PRNGKey(0)
    x = jax.random.normal(key, (2, 4, 16, 16), dtype=jnp.float32)

    std = 0.1
    out = gaussian_noise(x, seed=1234, std=std, training=True)
    jax.block_until_ready(out)

    assert out.shape == x.shape and out.dtype == x.dtype

    resid = out - x
    assert float(jnp.abs(resid).max()) > 0.0                  # noise actually added
    assert abs(float(jnp.mean(resid))) < 0.03                 # ~zero mean
    resid_std = float(jnp.std(resid))
    assert 0.05 < resid_std < 0.2, resid_std                  # ~N(0, std^2) scale

    # a different seed gives different noise (fresh draw per forward pass)
    out2 = gaussian_noise(x, seed=4321, std=std, training=True)
    assert float(jnp.abs(out2 - out).max()) > 0.0

    # eval mode / std == 0 are identity, matching the PyTorch module
    assert bool(jnp.array_equal(gaussian_noise(x, seed=1, std=std, training=False), x))
    assert bool(jnp.array_equal(gaussian_noise(x, seed=1, std=0.0, training=True), x))

    print("KERNEL_OK")
</pallas_src>

<mosaic_0001>
module attributes {stable_mosaic.version = 11 : i64} {
  func.func @kernel(%arg0: i32, %arg1: memref<1xi32, #tpu.memory_space<smem>>, %arg2: memref<8x256xf32, #tpu.memory_space<vmem>>, %arg3: memref<8x256xf32, #tpu.memory_space<vmem>>) attributes {dimension_semantics = [#tpu.dimension_semantics<parallel>], iteration_bounds = array<i64: 1>, scalar_prefetch = 0 : i64, scratch_operands = 0 : i64, tpu.core_type = #tpu.core_type<tc>, window_params = [{transform_indices = @transform_0, window_bounds = array<i64: 1>}, {transform_indices = @transform_1, window_bounds = array<i64: 8, 256>}, {transform_indices = @transform_2, window_bounds = array<i64: 8, 256>}]} {
    %0 = tpu.iota {dimensions = array<i32: 0>} : vector<8x256xi32>
    %1 = tpu.iota {dimensions = array<i32: 1>} : vector<8x256xi32>
    %c8_i32 = arith.constant 8 : i32
    %2 = arith.muli %arg0, %c8_i32 : i32
    %3 = vector.broadcast %2 : i32 to vector<8x256xi32>
    %4 = arith.addi %0, %3 : vector<8x256xi32>
    %c256_i32 = arith.constant 256 : i32
    %5 = vector.broadcast %c256_i32 : i32 to vector<8x256xi32>
    %6 = arith.muli %4, %5 : vector<8x256xi32>
    %7 = arith.addi %6, %1 : vector<8x256xi32>
    %c0 = arith.constant 0 : index
    %8 = memref.load %arg1[%c0] : memref<1xi32, #tpu.memory_space<smem>>
    %c-1640531527_i32 = arith.constant -1640531527 : i32
    %9 = arith.muli %8, %c-1640531527_i32 : i32
    %c2135587861_i32 = arith.constant 2135587861 : i32
    %10 = arith.addi %9, %c2135587861_i32 : i32
    %11 = vector.broadcast %10 : i32 to vector<8x256xi32>
    %12 = arith.xori %7, %11 : vector<8x256xi32>
    %c16_i32 = arith.constant 16 : i32
    %13 = vector.broadcast %c16_i32 : i32 to vector<8x256xi32>
    %14 = arith.shrui %12, %13 : vector<8x256xi32>
    %15 = arith.xori %12, %14 : vector<8x256xi32>
    %c2146121005_i32 = arith.constant 2146121005 : i32
    %16 = vector.broadcast %c2146121005_i32 : i32 to vector<8x256xi32>
    %17 = arith.muli %15, %16 : vector<8x256xi32>
    %c15_i32 = arith.constant 15 : i32
    %18 = vector.broadcast %c15_i32 : i32 to vector<8x256xi32>
    %19 = arith.shrui %17, %18 : vector<8x256xi32>
    %20 = arith.xori %17, %19 : vector<8x256xi32>
    %c-2073254261_i32 = arith.constant -2073254261 : i32
    %21 = vector.broadcast %c-2073254261_i32 : i32 to vector<8x256xi32>
    %22 = arith.muli %20, %21 : vector<8x256xi32>
    %c16_i32_0 = arith.constant 16 : i32
    %23 = vector.broadcast %c16_i32_0 : i32 to vector<8x256xi32>
    %24 = arith.shrui %22, %23 : vector<8x256xi32>
    %25 = arith.xori %22, %24 : vector<8x256xi32>
    %26 = vector.broadcast %10 : i32 to vector<8x256xi32>
    %27 = arith.addi %25, %26 : vector<8x256xi32>
    %c16_i32_1 = arith.constant 16 : i32
    %28 = vector.broadcast %c16_i32_1 : i32 to vector<8x256xi32>
    %29 = arith.shrui %27, %28 : vector<8x256xi32>
    %30 = arith.xori %27, %29 : vector<8x256xi32>
    %c2146121005_i32_2 = arith.constant 2146121005 : i32
    %31 = vector.broadcast %c2146121005_i32_2 : i32 to vector<8x256xi32>
    %32 = arith.muli %30, %31 : vector<8x256xi32>
    %c15_i32_3 = arith.constant 15 : i32
    %33 = vector.broadcast %c15_i32_3 : i32 to vector<8x256xi32>
    %34 = arith.shrui %32, %33 : vector<8x256xi32>
    %35 = arith.xori %32, %34 : vector<8x256xi32>
    %c-2073254261_i32_4 = arith.constant -2073254261 : i32
    %36 = vector.broadcast %c-2073254261_i32_4 : i32 to vector<8x256xi32>
    %37 = arith.muli %35, %36 : vector<8x256xi32>
    %c16_i32_5 = arith.constant 16 : i32
    %38 = vector.broadcast %c16_i32_5 : i32 to vector<8x256xi32>
    %39 = arith.shrui %37, %38 : vector<8x256xi32>
    %40 = arith.xori %37, %39 : vector<8x256xi32>
    %c9_i32 = arith.constant 9 : i32
    %41 = vector.broadcast %c9_i32 : i32 to vector<8x256xi32>
    %42 = arith.shrui %40, %41 : vector<8x256xi32>
    %43 = arith.sitofp %42 : vector<8x256xi32> to vector<8x256xf32>
    %cst = arith.constant 5.000000e-01 : f32
    %44 = vector.broadcast %cst : f32 to vector<8x256xf32>
    %45 = arith.addf %43, %44 : vector<8x256xf32>
    %cst_6 = arith.constant 1.1920929E-7 : f32
    %46 = vector.broadcast %cst_6 : f32 to vector<8x256xf32>
    %47 = arith.mulf %45, %46 : vector<8x256xf32>
    %cst_7 = arith.constant 2.000000e+00 : f32
    %48 = vector.broadcast %cst_7 : f32 to vector<8x256xf32>
    %49 = arith.mulf %48, %47 : vector<8x256xf32>
    %cst_8 = arith.constant 1.000000e+00 : f32
    %50 = vector.broadcast %cst_8 : f32 to vector<8x256xf32>
    %51 = arith.subf %49, %50 : vector<8x256xf32>
    %cst_9 = arith.constant 1.000000e+00 : f32
    %52 = vector.broadcast %cst_9 : f32 to vector<8x256xf32>
    %53 = arith.subf %52, %51 : vector<8x256xf32>
    %cst_10 = arith.constant 1.000000e+00 : f32
    %54 = vector.broadcast %cst_10 : f32 to vector<8x256xf32>
    %55 = arith.addf %54, %51 : vector<8x256xf32>
    %56 = arith.mulf %53, %55 : vector<8x256xf32>
    %57 = math.log %56 : vector<8x256xf32>
    %cst_11 = arith.constant 0.000000e+00 : f32
    %58 = vector.broadcast %cst_11 : f32 to vector<8x256xf32>
    %59 = arith.subf %58, %57 : vector<8x256xf32>
    %cst_12 = arith.constant 2.500000e+00 : f32
    %60 = vector.broadcast %cst_12 : f32 to vector<8x256xf32>
    %61 = arith.subf %59, %60 : vector<8x256xf32>
    %cst_13 = arith.constant 2.81022636E-8 : f32
    %62 = vector.broadcast %cst_13 : f32 to vector<8x256xf32>
    %63 = arith.mulf %62, %61 : vector<8x256xf32>
    %cst_14 = arith.constant 3.43273939E-7 : f32
    %64 = vector.broadcast %cst_14 : f32 to vector<8x256xf32>
    %65 = arith.addf %63, %64 : vector<8x256xf32>
    %66 = arith.mulf %65, %61 : vector<8x256xf32>
    %cst_15 = arith.constant -3.5233877E-6 : f32
    %67 = vector.broadcast %cst_15 : f32 to vector<8x256xf32>
    %68 = arith.addf %66, %67 : vector<8x256xf32>
    %69 = arith.mulf %68, %61 : vector<8x256xf32>
    %cst_16 = arith.constant -4.39150654E-6 : f32
    %70 = vector.broadcast %cst_16 : f32 to vector<8x256xf32>
    %71 = arith.addf %69, %70 : vector<8x256xf32>
    %72 = arith.mulf %71, %61 : vector<8x256xf32>
    %cst_17 = arith.constant 2.1858087E-4 : f32
    %73 = vector.broadcast %cst_17 : f32 to vector<8x256xf32>
    %74 = arith.addf %72, %73 : vector<8x256xf32>
    %75 = arith.mulf %74, %61 : vector<8x256xf32>
    %cst_18 = arith.constant -0.00125372503 : f32
    %76 = vector.broadcast %cst_18 : f32 to vector<8x256xf32>
    %77 = arith.addf %75, %76 : vector<8x256xf32>
    %78 = arith.mulf %77, %61 : vector<8x256xf32>
    %cst_19 = arith.constant -0.00417768164 : f32
    %79 = vector.broadcast %cst_19 : f32 to vector<8x256xf32>
    %80 = arith.addf %78, %79 : vector<8x256xf32>
    %81 = arith.mulf %80, %61 : vector<8x256xf32>
    %cst_20 = arith.constant 0.246640727 : f32
    %82 = vector.broadcast %cst_20 : f32 to vector<8x256xf32>
    %83 = arith.addf %81, %82 : vector<8x256xf32>
    %84 = arith.mulf %83, %61 : vector<8x256xf32>
    %cst_21 = arith.constant 1.50140941 : f32
    %85 = vector.broadcast %cst_21 : f32 to vector<8x256xf32>
    %86 = arith.addf %84, %85 : vector<8x256xf32>
    %cst_22 = arith.constant 5.000000e+00 : f32
    %87 = vector.broadcast %cst_22 : f32 to vector<8x256xf32>
    %88 = arith.maximumf %59, %87 : vector<8x256xf32>
    %89 = math.sqrt %88 : vector<8x256xf32>
    %cst_23 = arith.constant 3.000000e+00 : f32
    %90 = vector.broadcast %cst_23 : f32 to vector<8x256xf32>
    %91 = arith.subf %89, %90 : vector<8x256xf32>
    %cst_24 = arith.constant -2.00214257E-4 : f32
    %92 = vector.broadcast %cst_24 : f32 to vector<8x256xf32>
    %93 = arith.mulf %92, %91 : vector<8x256xf32>
    %cst_25 = arith.constant 1.00950558E-4 : f32
    %94 = vector.broadcast %cst_25 : f32 to vector<8x256xf32>
    %95 = arith.addf %93, %94 : vector<8x256xf32>
    %96 = arith.mulf %95, %91 : vector<8x256xf32>
    %cst_26 = arith.constant 0.00134934322 : f32
    %97 = vector.broadcast %cst_26 : f32 to vector<8x256xf32>
    %98 = arith.addf %96, %97 : vector<8x256xf32>
    %99 = arith.mulf %98, %91 : vector<8x256xf32>
    %cst_27 = arith.constant -0.00367342844 : f32
    %100 = vector.broadcast %cst_27 : f32 to vector<8x256xf32>
    %101 = arith.addf %99, %100 : vector<8x256xf32>
    %102 = arith.mulf %101, %91 : vector<8x256xf32>
    %cst_28 = arith.constant 0.00573950773 : f32
    %103 = vector.broadcast %cst_28 : f32 to vector<8x256xf32>
    %104 = arith.addf %102, %103 : vector<8x256xf32>
    %105 = arith.mulf %104, %91 : vector<8x256xf32>
    %cst_29 = arith.constant -0.0076224613 : f32
    %106 = vector.broadcast %cst_29 : f32 to vector<8x256xf32>
    %107 = arith.addf %105, %106 : vector<8x256xf32>
    %108 = arith.mulf %107, %91 : vector<8x256xf32>
    %cst_30 = arith.constant 0.00943887047 : f32
    %109 = vector.broadcast %cst_30 : f32 to vector<8x256xf32>
    %110 = arith.addf %108, %109 : vector<8x256xf32>
    %111 = arith.mulf %110, %91 : vector<8x256xf32>
    %cst_31 = arith.constant 1.00167406 : f32
    %112 = vector.broadcast %cst_31 : f32 to vector<8x256xf32>
    %113 = arith.addf %111, %112 : vector<8x256xf32>
    %114 = arith.mulf %113, %91 : vector<8x256xf32>
    %cst_32 = arith.constant 2.83297682 : f32
    %115 = vector.broadcast %cst_32 : f32 to vector<8x256xf32>
    %116 = arith.addf %114, %115 : vector<8x256xf32>
    %cst_33 = arith.constant 5.000000e+00 : f32
    %117 = vector.broadcast %cst_33 : f32 to vector<8x256xf32>
    %118 = arith.cmpf olt, %59, %117 : vector<8x256xf32>
    %119 = arith.select %118, %86, %116 : vector<8x256xi1>, vector<8x256xf32>
    %120 = arith.mulf %119, %51 : vector<8x256xf32>
    %cst_34 = arith.constant 1.41421354 : f32
    %121 = vector.broadcast %cst_34 : f32 to vector<8x256xf32>
    %122 = arith.mulf %121, %120 : vector<8x256xf32>
    %c0_35 = arith.constant 0 : index
    %c0_36 = arith.constant 0 : index
    %123 = vector.load %arg2[%c0_35, %c0_36] : memref<8x256xf32, #tpu.memory_space<vmem>>, vector<8x256xf32>
    %cst_37 = arith.constant 1.000000e-01 : f32
    %124 = vector.broadcast %cst_37 : f32 to vector<8x256xf32>
    %125 = arith.mulf %124, %122 : vector<8x256xf32>
    %126 = arith.addf %123, %125 : vector<8x256xf32>
    %c0_38 = arith.constant 0 : index
    %c0_39 = arith.constant 0 : index
    %127 = vector.load %arg3[%c0_38, %c0_39] : memref<8x256xf32, #tpu.memory_space<vmem>>, vector<8x256xf32>
    tpu.vector_store %arg3[%c0_38, %c0_39], %126 {strides = array<i32>} : memref<8x256xf32, #tpu.memory_space<vmem>>, vector<8x256xf32>,
    return
  }
  func.func @transform_0(%arg0: i32) -> i32 {
    %c0_i32 = arith.constant 0 : i32
    %c0_i32_0 = arith.constant 0 : i32
    return %c0_i32 : i32
  }
  func.func @transform_1(%arg0: i32) -> (i32, i32) {
    %c0_i32 = arith.constant 0 : i32
    %c0_i32_0 = arith.constant 0 : i32
    return %arg0, %c0_i32 : i32, i32
  }
  func.func @transform_2(%arg0: i32) -> (i32, i32) {
    %c0_i32 = arith.constant 0 : i32
    %c0_i32_0 = arith.constant 0 : i32
    return %arg0, %c0_i32 : i32, i32
  }
}

</mosaic_0001>

<llo_original>
// kernel: tpu_custom_call.1
$region0: #{tpu_custom_call.1}
  #allocation0 [shape = 'u32[]', space=smem, size = 0x4, offset = 0x4, fixed_abs, tag = 'smem constant byte address 0x4 - core index']
  #allocation1 [shape = 'u32[144,128]{1,0:T(1,128)}', space=vmem, size = 0x12000, scoped, tag = 'internal scratch']
  #allocation2 [shape = 's32[1]{0:T(128)S(6)}', space=smem, size = 0x200, scoped, tag = 'scoped memory for tpu_custom_call.1']
  %s0 = inlined_call_operand.<no memory space> [shape: s32[1], index: 0, kind: input, shape index: {}]
  %s1 = inlined_call_operand.hbm [shape: f32[8,256], index: 1, kind: input, shape index: {}]
  %s2 = inlined_call_operand.hbm [shape: f32[8,256], index: 2, kind: output, shape index: {}]
  %s3 = sld [smem:[#allocation0]]
  $region22: #{tpu_custom_call.1} parent=0
    _
  %s5 = ssub.s32 1, %s3
  %s6 = scalar_select 0, %s5, %s3
  %7 = sst [smem:[#allocation2]] %s0
  $region1: #{tpu_custom_call.1} parent=0
    #allocation3 [shape = 'u8[8192]{0}', space=vmem, size = 0x2000, scoped, tag = 'input window, operand 1, single buffered']
    #allocation4 [shape = 's32[1]{0}', space=sflag, size = 0x4, scoped, tag = 'scoped memory for tpu_custom_call.1']
    #allocation5 [shape = 's32[1]{0}', space=sflag, size = 0x4, scoped, tag = 'scoped memory for tpu_custom_call.1']
    #allocation6 [shape = 'u8[8192]{0}', space=vmem, size = 0x2000, scoped, tag = 'output window, operand 0, single buffered']
    %8 = vsyncpa [#allocation4], 0
    %9 = vsyncpa [#allocation5], 0
    // Predicated region
    $region2: #{tpu_custom_call.1} parent=1 // pred_check
      _
    $region3: #{tpu_custom_call.1} parent=1 // pred_check_branch
      %11 = sbr.rel (0) target = $region5
    $region4: #{tpu_custom_call.1} parent=1 // pred_region
      _
    $region5: #{tpu_custom_call.1} parent=1 // pred_fallthru
      _
    // Predicated region
    $region6: #{tpu_custom_call.1} parent=1 // pred_check
      _
    $region7: #{tpu_custom_call.1} parent=1 // pred_check_branch
      %13 = sbr.rel (0) target = $region9
    $region8: #{tpu_custom_call.1} parent=1 // pred_region
      %s15 = ssub.s32 256, 256
      %16 = vsyncadd [#allocation4], %s15
      %s18 = sshll.u32 [#allocation3], 4
      %s19 = int_to_ptr.vmem [resolvable:$true] %s18
      %21 = dma.hbm_to_vmem [thread:$0]  %s1, 256, %s19, [#allocation4]
    $region9: #{tpu_custom_call.1} parent=1 // pred_fallthru
      _
    // Predicated region
    $region10: #{tpu_custom_call.1} parent=1 // pred_check
      _
    $region11: #{tpu_custom_call.1} parent=1 // pred_check_branch
      %23 = sbr.rel (0) target = $region13
    $region12: #{tpu_custom_call.1} parent=1 // pred_region
      %24 = dma.done [#allocation4], 256
    $region13: #{tpu_custom_call.1} parent=1 // pred_fallthru
      _
    %v25 = vlaneseq
    %v26 = vshrl.u32 %v25, 7
    %v27 = vlaneseq
    %v28 = vand.u32 %v27, 127
    %v29 = vadd.s32 %v28, 128
    %s30 = smul.u32 0, 8
    %v31 = vstv %s30
    %v32 = vadd.s32 %v26, %v31
    %v33 = vmul.u32 %v32, 256
    %v34 = vadd.s32 %v33, %v28
    %v35 = vadd.s32 %v33, %v29
    %s36 = sld [smem:[#allocation2]]
    %s37 = smul.u32 %s36, 2654435769
    %s38 = sadd.s32 %s37, 2135587861
    %v39 = vstv %s38
    %v40 = vxor.u32 %v34, %v39
    %v41 = vxor.u32 %v35, %v39
    %v42 = vshrl.u32 %v40, 16
    %v43 = vshrl.u32 %v41, 16
    %v44 = vxor.u32 %v40, %v42
    %v45 = vxor.u32 %v41, %v43
    %v46 = vmul.u32 %v44, 2146121005
    %v47 = vmul.u32 %v45, 2146121005
    %v48 = vshrl.u32 %v46, 15
    %v49 = vshrl.u32 %v47, 15
    %v50 = vxor.u32 %v46, %v48
    %v51 = vxor.u32 %v47, %v49
    %v52 = vmul.u32 %v50, 2221713035
    %v53 = vmul.u32 %v51, 2221713035
    %v54 = vshrl.u32 %v52, 16
    %v55 = vshrl.u32 %v53, 16
    %v56 = vxor.u32 %v52, %v54
    %v57 = vxor.u32 %v53, %v55
    %v58 = vadd.s32 %v56, %v39
    %v59 = vadd.s32 %v57, %v39
    %v60 = vshrl.u32 %v58, 16
    %v61 = vshrl.u32 %v59, 16
    %v62 = vxor.u32 %v58, %v60
    %v63 = vxor.u32 %v59, %v61
    %v64 = vmul.u32 %v62, 2146121005
    %v65 = vmul.u32 %v63, 2146121005
    %v66 = vshrl.u32 %v64, 15
    %v67 = vshrl.u32 %v65, 15
    %v68 = vxor.u32 %v64, %v66
    %v69 = vxor.u32 %v65, %v67
    %v70 = vmul.u32 %v68, 2221713035
    %v71 = vmul.u32 %v69, 2221713035
    %v72 = vshrl.u32 %v70, 16
    %v73 = vshrl.u32 %v71, 16
    %v74 = vxor.u32 %v70, %v72
    %v75 = vxor.u32 %v71, %v73
    %v76 = vshrl.u32 %v74, 9
    %v77 = vshrl.u32 %v75, 9
    %v78 = vcvt.s32.f32 %v76
    %v79 = vcvt.s32.f32 %v77
    %v80 = vadd.f32 %v78, 0.5
    %v81 = vadd.f32 %v79, 0.5
    %v82 = vmul.f32 %v80, 1.1920929e-07
    %v83 = vmul.f32 %v81, 1.1920929e-07
    %v84 = vmul.f32 %v82, 2.0
    %v85 = vmul.f32 %v83, 2.0
    %v86 = vsub.f32 %v84, 1.0
    %v87 = vsub.f32 %v85, 1.0
    %v88 = vsub.f32 1.0, %v86
    %v89 = vsub.f32 1.0, %v87
    %v90 = vadd.f32 %v86, 1.0
    %v91 = vadd.f32 %v87, 1.0
    %v92 = vmul.f32 %v88, %v90
    %v93 = vmul.f32 %v89, %v91
    %v94 = vlog2.pop %v92
    %v95 = vmul.f32 %v94, 0.6931472
    %v96 = vlog2.pop %v93
    %v97 = vmul.f32 %v96, 0.6931472
    %v98 = vsub.f32 0.0, %v95
    %v99 = vsub.f32 0.0, %v97
    %v100 = vsub.f32 %v98, 2.5
    %v101 = vsub.f32 %v99, 2.5
    %v102 = vmul.f32 %v100, 2.8102264e-08
    %v103 = vmul.f32 %v101, 2.8102264e-08
    %v104 = vadd.f32 %v102, 3.4327394e-07
    %v105 = vadd.f32 %v103, 3.4327394e-07
    %v106 = vmul.f32 %v104, %v100
    %v107 = vmul.f32 %v105, %v101
    %v108 = vadd.f32 %v106, -3.5233877e-06
    %v109 = vadd.f32 %v107, -3.5233877e-06
    %v110 = vmul.f32 %v108, %v100
    %v111 = vmul.f32 %v109, %v101
    %v112 = vadd.f32 %v110, -4.3915065e-06
    %v113 = vadd.f32 %v111, -4.3915065e-06
    %v114 = vmul.f32 %v112, %v100
    %v115 = vmul.f32 %v113, %v101
    %v116 = vadd.f32 %v114, 0.00021858087
    %v117 = vadd.f32 %v115, 0.00021858087
    %v118 = vmul.f32 %v116, %v100
    %v119 = vmul.f32 %v117, %v101
    %v120 = vadd.f32 %v118, -0.001253725
    %v121 = vadd.f32 %v119, -0.001253725
    %v122 = vmul.f32 %v120, %v100
    %v123 = vmul.f32 %v121, %v101
    %v124 = vadd.f32 %v122, -0.0041776816
    %v125 = vadd.f32 %v123, -0.0041776816
    %v126 = vmul.f32 %v124, %v100
    %v127 = vmul.f32 %v125, %v101
    %v128 = vadd.f32 %v126, 0.24664073
    %v129 = vadd.f32 %v127, 0.24664073
    %v130 = vmul.f32 %v128, %v100
    %v131 = vmul.f32 %v129, %v101
    %v132 = vadd.f32 %v130, 1.5014094
    %v133 = vadd.f32 %v131, 1.5014094
    %v134 = vmax.f32 %v98, 5.0
    %v135 = vmax.f32 %v99, 5.0
    %v136 = vrsqrt.pop %v134
    %v137 = vmul.f32 %v134, %v136
    %vm138 = vcmp.eq.f32.partialorder %v134, inf
    %v139 = vsel %vm138, %v134, %v137
    %vm140 = vcmp.eq.f32.partialorder %v134, 0.0
    %v141 = vand.u32 %v134, 2147483648
    %v142 = vsel %vm140, %v141, %v139
    %v143 = vrsqrt.pop %v135
    %v144 = vmul.f32 %v135, %v143
    %vm145 = vcmp.eq.f32.partialorder %v135, inf
    %v146 = vsel %vm145, %v135, %v144
    %vm147 = vcmp.eq.f32.partialorder %v135, 0.0
    %v148 = vand.u32 %v135, 2147483648
    %v149 = vsel %vm147, %v148, %v146
    %v150 = vsub.f32 %v142, 3.0
    %v151 = vsub.f32 %v149, 3.0
    %v152 = vmul.f32 %v150, -0.00020021426
    %v153 = vmul.f32 %v151, -0.00020021426
    %v154 = vadd.f32 %v152, 0.00010095056
    %v155 = vadd.f32 %v153, 0.00010095056
    %v156 = vmul.f32 %v154, %v150
    %v157 = vmul.f32 %v155, %v151
    %v158 = vadd.f32 %v156, 0.0013493432
    %v159 = vadd.f32 %v157, 0.0013493432
    %v160 = vmul.f32 %v158, %v150
    %v161 = vmul.f32 %v159, %v151
    %v162 = vadd.f32 %v160, -0.0036734284
    %v163 = vadd.f32 %v161, -0.0036734284
    %v164 = vmul.f32 %v162, %v150
    %v165 = vmul.f32 %v163, %v151
    %v166 = vadd.f32 %v164, 0.0057395077
    %v167 = vadd.f32 %v165, 0.0057395077
    %v168 = vmul.f32 %v166, %v150
    %v169 = vmul.f32 %v167, %v151
    %v170 = vadd.f32 %v168, -0.0076224613
    %v171 = vadd.f32 %v169, -0.0076224613
    %v172 = vmul.f32 %v170, %v150
    %v173 = vmul.f32 %v171, %v151
    %v174 = vadd.f32 %v172, 0.0094388705
    %v175 = vadd.f32 %v173, 0.0094388705
    %v176 = vmul.f32 %v174, %v150
    %v177 = vmul.f32 %v175, %v151
    %v178 = vadd.f32 %v176, 1.001674
    %v179 = vadd.f32 %v177, 1.001674
    %v180 = vmul.f32 %v178, %v150
    %v181 = vmul.f32 %v179, %v151
    %v182 = vadd.f32 %v180, 2.8329768
    %v183 = vadd.f32 %v181, 2.8329768
    %vm184 = vcmp.lt.f32.partialorder %v98, 5.0
    %vm185 = vcmp.lt.f32.partialorder %v99, 5.0
    %v186 = vsel %vm184, %v132, %v182
    %v187 = vsel %vm185, %v133, %v183
    %v188 = vmul.f32 %v186, %v86
    %v189 = vmul.f32 %v187, %v87
    %v190 = vmul.f32 %v188, 1.4142135
    %v191 = vmul.f32 %v189, 1.4142135
    %v192 = vld [vmem:[#allocation3] sm:$0xff]
    %v193 = vld [vmem:[#allocation3 + $0x8] sm:$0xff]
    %v194 = vmul.f32 %v190, 0.1
    %v195 = vmul.f32 %v191, 0.1
    %v196 = vadd.f32 %v192, %v194
    %v197 = vadd.f32 %v193, %v195
    %198 = vst [vmem:[#allocation6] sm:$0xff] %v196
    %199 = vst [vmem:[#allocation6 + $0x8] sm:$0xff] %v197
    // Predicated region
    $region14: #{tpu_custom_call.1} parent=1 // pred_check
      _
    $region15: #{tpu_custom_call.1} parent=1 // pred_check_branch
      %201 = sbr.rel (0) target = $region17
    $region16: #{tpu_custom_call.1} parent=1 // pred_region
      %s203 = ssub.s32 256, 256
      %204 = vsyncadd [#allocation5], %s203
      %s206 = sshll.u32 [#allocation6], 4
      %s207 = int_to_ptr.vmem [resolvable:$true] %s206
      %209 = dma.vmem_to_hbm [thread:$0]  %s207, 256, %s2, [#allocation5]
    $region17: #{tpu_custom_call.1} parent=1 // pred_fallthru
      _
    // Predicated region
    $region18: #{tpu_custom_call.1} parent=1 // pred_check
      _
    $region19: #{tpu_custom_call.1} parent=1 // pred_check_branch
      %211 = sbr.rel (0) target = $region21
    $region20: #{tpu_custom_call.1} parent=1 // pred_region
      %212 = dma.done [#allocation5], 256
    $region21: #{tpu_custom_call.1} parent=1 // pred_fallthru
      _
    %213 = vsyncpa [#allocation4], 1
    %214 = vsyncpa [#allocation5], 1

</llo_original>
